<compile_context>
chip_gen: v5e
topology: v5e:2x2
jax: 0.10.0
libtpu: 0.0.40
codegen_flags: <defaults>
</compile_context>

<pallas_src>
import functools
import math

import jax
import jax.numpy as jnp
from jax.experimental import pallas as pl
from jax.experimental.pallas import tpu as pltpu


def _round_up(x, m):
    return ((x + m - 1) // m) * m


def actor_kernel(num_layers, x_ref, w0_ref, b0_ref, *rest):
    """Whole forward pass for one batch tile, entirely in VMEM.

    rest = (w_hid_ref (L,H,H), ln_ref (L,3,H)) if num_layers > 0, then
           w_out_ref (H, OUT_PAD), b_out_ref (1, OUT_PAD), out_ref (tile, OUT_PAD)
    """
    if num_layers > 0:
        w_hid_ref, ln_ref, w_out_ref, b_out_ref, out_ref = rest
    else:
        w_out_ref, b_out_ref, out_ref = rest

    # Input layer + tanh
    h = jnp.tanh(
        jnp.dot(x_ref[...], w0_ref[...], preferred_element_type=jnp.float32)
        + b0_ref[...]
    )

    # Hidden layers: Linear -> LayerNorm (unbiased std, eps added to std) -> tanh
    for l in range(num_layers):
        w = w_hid_ref[l]           # (H, H)
        blk = ln_ref[l]            # (3, H) rows: [bias, gamma, beta]
        b = blk[0:1]
        gamma = blk[1:2]
        beta = blk[2:3]

        z = jnp.dot(h, w, preferred_element_type=jnp.float32) + b
        n = z.shape[-1]
        mean = jnp.mean(z, axis=-1, keepdims=True)
        c = z - mean                                           # centered, reused
        var = jnp.sum(c * c, axis=-1, keepdims=True) * (1.0 / (n - 1))
        std = jnp.sqrt(var)
        # Reciprocal instead of divide; approx=False keeps the 1e-5 tolerance
        # (flip to approx=True to push it fully onto the EUP if tolerance allows).
        inv = pl.reciprocal(std + 1e-6, approx=False)
        h = jnp.tanh(c * (gamma * inv) + beta)

    # Output layer + Tanh. w_out/b_out are zero-padded to OUT_PAD lanes so the
    # store is lane-dense (no masked partial stores); padded lanes hold tanh(0)=0.
    out_ref[...] = jnp.tanh(
        jnp.dot(h, w_out_ref[...], preferred_element_type=jnp.float32)
        + b_out_ref[...]
    )


def _pack_params(params, num_layers, out_pad):
    """Pack the flat param list [w0,b0,(w,b,gamma,beta)*L,w_out,b_out] into a few
    stacked arrays to minimize per-input DMA/BlockSpec overhead."""
    w0, b0 = params[0], params[1]
    idx = 2
    w_hid, ln = [], []
    for _ in range(num_layers):
        w, b, g, be = params[idx], params[idx + 1], params[idx + 2], params[idx + 3]
        idx += 4
        w_hid.append(w)
        ln.append(jnp.concatenate([b, g, be], axis=0))  # (3, H)
    w_out, b_out = params[idx], params[idx + 1]
    action_dim = w_out.shape[1]
    pad = out_pad - action_dim
    w_out_p = jnp.pad(w_out, ((0, 0), (0, pad)))
    b_out_p = jnp.pad(b_out, ((0, 0), (0, pad)))

    packed = [w0, b0]
    if num_layers > 0:
        packed += [jnp.stack(w_hid, axis=0), jnp.stack(ln, axis=0)]
    packed += [w_out_p, b_out_p]
    return packed


def actor_forward(state, params, *, num_layers, action_dim, max_batch_tile=512):
    """params: flat list [w0, b0, (w_i, b_i, gamma_i, beta_i)*L, w_out, b_out]
    with weights shaped (in, out) and biases / ln params shaped (1, dim)."""
    batch, state_dim = state.shape
    out_pad = _round_up(max(action_dim, 128), 128)   # lane-dense output width

    packed = _pack_params(params, num_layers, out_pad)

    # --- batch tiling: few, large tiles; keep >=2 parallel steps when possible ---
    batch8 = _round_up(batch, 8)
    n_steps = pl.cdiv(batch8, max_batch_tile)
    if n_steps < 2 and batch8 >= 16:
        n_steps = 2  # give both v7x TensorCores work; harmless on v5e/v6e
    tile = _round_up(pl.cdiv(batch8, n_steps), 8)
    padded_batch = tile * n_steps

    x = state
    if padded_batch != batch:
        x = jnp.pad(x, ((0, padded_batch - batch), (0, 0)))

    in_specs = [pl.BlockSpec((tile, state_dim), lambda i: (i, 0))]
    for p in packed:
        if p.ndim == 3:
            in_specs.append(pl.BlockSpec(p.shape, lambda i: (0, 0, 0)))
        else:
            in_specs.append(pl.BlockSpec(p.shape, lambda i: (0, 0)))
    out_specs = pl.BlockSpec((tile, out_pad), lambda i: (i, 0))

    kernel = functools.partial(actor_kernel, num_layers)
    out_padded = pl.pallas_call(
        kernel,
        out_shape=jax.ShapeDtypeStruct((padded_batch, out_pad), jnp.float32),
        grid_spec=pltpu.PrefetchScalarGridSpec(
            num_scalar_prefetch=0,
            grid=(n_steps,),
            in_specs=in_specs,
            out_specs=out_specs,
        ),
        compiler_params=pltpu.CompilerParams(
            dimension_semantics=("parallel",)
        ),
    )(x, *packed)

    return out_padded[:batch, :action_dim]


def init_actor_params(key, state_dim, hidden, num_layers, action_dim):
    """Deterministic init mimicking PyTorch nn.Linear default: U(-1/sqrt(fan_in), +)."""
    params = []

    def linear(key, fan_in, fan_out):
        k = 1.0 / math.sqrt(fan_in)
        kw, kb = jax.random.split(key)
        w = jax.random.uniform(kw, (fan_in, fan_out), jnp.float32, -k, k)
        b = jax.random.uniform(kb, (1, fan_out), jnp.float32, -k, k)
        return w, b

    keys = jax.random.split(key, num_layers + 2)
    w, b = linear(keys[0], state_dim, hidden)
    params += [w, b]
    for i in range(num_layers):
        w, b = linear(keys[1 + i], hidden, hidden)
        gamma = jnp.ones((1, hidden), jnp.float32)
        beta = jnp.zeros((1, hidden), jnp.float32)
        params += [w, b, gamma, beta]
    w, b = linear(keys[-1], hidden, action_dim)
    params += [w, b]
    return params


def actor_forward_ref(state, params, *, num_layers):
    """Pure-JAX reference for correctness checking (PDERL LayerNorm semantics)."""
    idx = 0
    w, b = params[idx], params[idx + 1]
    idx += 2
    h = jnp.tanh(state @ w + b)
    for _ in range(num_layers):
        w, b, gamma, beta = params[idx], params[idx + 1], params[idx + 2], params[idx + 3]
        idx += 4
        z = h @ w + b
        mean = jnp.mean(z, axis=-1, keepdims=True)
        std = jnp.sqrt(jnp.sum((z - mean) ** 2, axis=-1, keepdims=True) / (z.shape[-1] - 1))
        h = jnp.tanh(gamma * (z - mean) / (std + 1e-6) + beta)
    w, b = params[idx], params[idx + 1]
    return jnp.tanh(h @ w + b)


if __name__ == "__main__":
    # args: state_dim=16, hidden_size=32, num_layers=2, action_dim=4, activation='tanh'
    STATE_DIM, HIDDEN, NUM_LAYERS, ACTION_DIM = 16, 32, 2, 4
    BATCH = 16

    root = jax.random.PRNGKey(0)
    k_x, k_p = jax.random.split(root)
    state = jax.random.normal(k_x, (BATCH, STATE_DIM), jnp.float32)
    params = init_actor_params(k_p, STATE_DIM, HIDDEN, NUM_LAYERS, ACTION_DIM)

    out = actor_forward(state, params, num_layers=NUM_LAYERS, action_dim=ACTION_DIM)
    out = jax.block_until_ready(out)

    ref = actor_forward_ref(state, params, num_layers=NUM_LAYERS)
    assert out.shape == (BATCH, ACTION_DIM)
    assert jnp.allclose(out, ref, atol=1e-5, rtol=1e-5), "mismatch vs pure-JAX reference"

    print("KERNEL_OK")
</pallas_src>

<mosaic_0001>
module attributes {stable_mosaic.version = 11 : i64} {
  func.func @actor_kernel(%arg0: i32, %arg1: memref<8x16xf32, #tpu.memory_space<vmem>>, %arg2: memref<16x32xf32, #tpu.memory_space<vmem>>, %arg3: memref<1x32xf32, #tpu.memory_space<vmem>>, %arg4: memref<2x32x32xf32, #tpu.memory_space<vmem>>, %arg5: memref<2x3x32xf32, #tpu.memory_space<vmem>>, %arg6: memref<32x128xf32, #tpu.memory_space<vmem>>, %arg7: memref<1x128xf32, #tpu.memory_space<vmem>>, %arg8: memref<8x128xf32, #tpu.memory_space<vmem>>) attributes {dimension_semantics = [#tpu.dimension_semantics<parallel>], iteration_bounds = array<i64: 2>, scalar_prefetch = 0 : i64, scratch_operands = 0 : i64, tpu.core_type = #tpu.core_type<tc>, window_params = [{transform_indices = @transform_0, window_bounds = array<i64: 8, 16>}, {pipeline_mode = #tpu.pipeline_mode<synchronous>, transform_indices = @transform_1, window_bounds = array<i64: 16, 32>}, {pipeline_mode = #tpu.pipeline_mode<synchronous>, transform_indices = @transform_2, window_bounds = array<i64: 1, 32>}, {pipeline_mode = #tpu.pipeline_mode<synchronous>, transform_indices = @transform_3, window_bounds = array<i64: 2, 32, 32>}, {pipeline_mode = #tpu.pipeline_mode<synchronous>, transform_indices = @transform_4, window_bounds = array<i64: 2, 3, 32>}, {pipeline_mode = #tpu.pipeline_mode<synchronous>, transform_indices = @transform_5, window_bounds = array<i64: 32, 128>}, {pipeline_mode = #tpu.pipeline_mode<synchronous>, transform_indices = @transform_6, window_bounds = array<i64: 1, 128>}, {transform_indices = @transform_7, window_bounds = array<i64: 8, 128>}]} {
    %c0 = arith.constant 0 : index
    %c0_0 = arith.constant 0 : index
    %0 = vector.load %arg1[%c0, %c0_0] : memref<8x16xf32, #tpu.memory_space<vmem>>, vector<8x16xf32>
    %c0_1 = arith.constant 0 : index
    %c0_2 = arith.constant 0 : index
    %1 = vector.load %arg2[%c0_1, %c0_2] : memref<16x32xf32, #tpu.memory_space<vmem>>, vector<16x32xf32>
    %cst = arith.constant dense<0.000000e+00> : vector<8x32xf32>
    %2 = tpu.matmul %0, %1, %cst {dimension_numbers = #tpu.dot_dimension_numbers<[1], [0], [0], [1], [0, 0, 1, 1], [], []>} : vector<8x16xf32>, vector<16x32xf32>, vector<8x32xf32> -> vector<8x32xf32>
    %c0_3 = arith.constant 0 : index
    %c0_4 = arith.constant 0 : index
    %3 = vector.load %arg3[%c0_3, %c0_4] : memref<1x32xf32, #tpu.memory_space<vmem>>, vector<1x32xf32>
    %4 = vector.broadcast %3 : vector<1x32xf32> to vector<8x32xf32>
    %5 = arith.addf %2, %4 : vector<8x32xf32>
    %6 = math.tanh %5 : vector<8x32xf32>
    %c0_5 = arith.constant 0 : index
    %c0_6 = arith.constant 0 : index
    %c0_7 = arith.constant 0 : index
    %7 = vector.load %arg4[%c0_5, %c0_6, %c0_7] : memref<2x32x32xf32, #tpu.memory_space<vmem>>, vector<1x32x32xf32>
    %8 = vector.shape_cast %7 : vector<1x32x32xf32> to vector<32x32xf32>
    %c0_8 = arith.constant 0 : index
    %c0_9 = arith.constant 0 : index
    %c0_10 = arith.constant 0 : index
    %9 = vector.load %arg5[%c0_8, %c0_9, %c0_10] : memref<2x3x32xf32, #tpu.memory_space<vmem>>, vector<1x3x32xf32>
    %10 = vector.shape_cast %9 : vector<1x3x32xf32> to vector<3x32xf32>
    %11 = vector.extract_strided_slice %10 {offsets = [0, 0], sizes = [1, 32], strides = [1, 1]} : vector<3x32xf32> to vector<1x32xf32>
    %12 = vector.extract_strided_slice %10 {offsets = [1, 0], sizes = [1, 32], strides = [1, 1]} : vector<3x32xf32> to vector<1x32xf32>
    %13 = vector.extract_strided_slice %10 {offsets = [2, 0], sizes = [1, 32], strides = [1, 1]} : vector<3x32xf32> to vector<1x32xf32>
    %cst_11 = arith.constant dense<0.000000e+00> : vector<8x32xf32>
    %14 = tpu.matmul %6, %8, %cst_11 {dimension_numbers = #tpu.dot_dimension_numbers<[1], [0], [0], [1], [0, 0, 1, 1], [], []>} : vector<8x32xf32>, vector<32x32xf32>, vector<8x32xf32> -> vector<8x32xf32>
    %15 = vector.broadcast %11 : vector<1x32xf32> to vector<8x32xf32>
    %16 = arith.addf %14, %15 : vector<8x32xf32>
    %cst_12 = arith.constant dense<0.000000e+00> : vector<8xf32>
    %17 = vector.multi_reduction <add>, %16, %cst_12 [1] : vector<8x32xf32> to vector<8xf32>
    %18 = vector.shape_cast %17 : vector<8xf32> to vector<8x1xf32>
    %cst_13 = arith.constant 3.200000e+01 : f32
    %19 = vector.broadcast %cst_13 : f32 to vector<8x1xf32>
    %20 = arith.divf %18, %19 : vector<8x1xf32>
    %21 = vector.broadcast %20 : vector<8x1xf32> to vector<8x32xf32>
    %22 = arith.subf %16, %21 : vector<8x32xf32>
    %23 = arith.mulf %22, %22 : vector<8x32xf32>
    %cst_14 = arith.constant dense<0.000000e+00> : vector<8xf32>
    %24 = vector.multi_reduction <add>, %23, %cst_14 [1] : vector<8x32xf32> to vector<8xf32>
    %25 = vector.shape_cast %24 : vector<8xf32> to vector<8x1xf32>
    %cst_15 = arith.constant 0.0322580636 : f32
    %26 = vector.broadcast %cst_15 : f32 to vector<8x1xf32>
    %27 = arith.mulf %25, %26 : vector<8x1xf32>
    %28 = math.sqrt %27 : vector<8x1xf32>
    %cst_16 = arith.constant 9.99999997E-7 : f32
    %29 = vector.broadcast %cst_16 : f32 to vector<8x1xf32>
    %30 = arith.addf %28, %29 : vector<8x1xf32>
    %31 = tpu.reciprocal %30 : vector<8x1xf32> -> vector<8x1xf32>
    %32 = vector.broadcast %12 : vector<1x32xf32> to vector<8x32xf32>
    %33 = vector.broadcast %31 : vector<8x1xf32> to vector<8x32xf32>
    %34 = arith.mulf %32, %33 : vector<8x32xf32>
    %35 = arith.mulf %22, %34 : vector<8x32xf32>
    %36 = vector.broadcast %13 : vector<1x32xf32> to vector<8x32xf32>
    %37 = arith.addf %35, %36 : vector<8x32xf32>
    %38 = math.tanh %37 : vector<8x32xf32>
    %c1 = arith.constant 1 : index
    %c0_17 = arith.constant 0 : index
    %c0_18 = arith.constant 0 : index
    %39 = vector.load %arg4[%c1, %c0_17, %c0_18] : memref<2x32x32xf32, #tpu.memory_space<vmem>>, vector<1x32x32xf32>
    %40 = vector.shape_cast %39 : vector<1x32x32xf32> to vector<32x32xf32>
    %c1_19 = arith.constant 1 : index
    %c0_20 = arith.constant 0 : index
    %c0_21 = arith.constant 0 : index
    %41 = vector.load %arg5[%c1_19, %c0_20, %c0_21] : memref<2x3x32xf32, #tpu.memory_space<vmem>>, vector<1x3x32xf32>
    %42 = vector.shape_cast %41 : vector<1x3x32xf32> to vector<3x32xf32>
    %43 = vector.extract_strided_slice %42 {offsets = [0, 0], sizes = [1, 32], strides = [1, 1]} : vector<3x32xf32> to vector<1x32xf32>
    %44 = vector.extract_strided_slice %42 {offsets = [1, 0], sizes = [1, 32], strides = [1, 1]} : vector<3x32xf32> to vector<1x32xf32>
    %45 = vector.extract_strided_slice %42 {offsets = [2, 0], sizes = [1, 32], strides = [1, 1]} : vector<3x32xf32> to vector<1x32xf32>
    %cst_22 = arith.constant dense<0.000000e+00> : vector<8x32xf32>
    %46 = tpu.matmul %38, %40, %cst_22 {dimension_numbers = #tpu.dot_dimension_numbers<[1], [0], [0], [1], [0, 0, 1, 1], [], []>} : vector<8x32xf32>, vector<32x32xf32>, vector<8x32xf32> -> vector<8x32xf32>
    %47 = vector.broadcast %43 : vector<1x32xf32> to vector<8x32xf32>
    %48 = arith.addf %46, %47 : vector<8x32xf32>
    %cst_23 = arith.constant dense<0.000000e+00> : vector<8xf32>
    %49 = vector.multi_reduction <add>, %48, %cst_23 [1] : vector<8x32xf32> to vector<8xf32>
    %50 = vector.shape_cast %49 : vector<8xf32> to vector<8x1xf32>
    %cst_24 = arith.constant 3.200000e+01 : f32
    %51 = vector.broadcast %cst_24 : f32 to vector<8x1xf32>
    %52 = arith.divf %50, %51 : vector<8x1xf32>
    %53 = vector.broadcast %52 : vector<8x1xf32> to vector<8x32xf32>
    %54 = arith.subf %48, %53 : vector<8x32xf32>
    %55 = arith.mulf %54, %54 : vector<8x32xf32>
    %cst_25 = arith.constant dense<0.000000e+00> : vector<8xf32>
    %56 = vector.multi_reduction <add>, %55, %cst_25 [1] : vector<8x32xf32> to vector<8xf32>
    %57 = vector.shape_cast %56 : vector<8xf32> to vector<8x1xf32>
    %cst_26 = arith.constant 0.0322580636 : f32
    %58 = vector.broadcast %cst_26 : f32 to vector<8x1xf32>
    %59 = arith.mulf %57, %58 : vector<8x1xf32>
    %60 = math.sqrt %59 : vector<8x1xf32>
    %cst_27 = arith.constant 9.99999997E-7 : f32
    %61 = vector.broadcast %cst_27 : f32 to vector<8x1xf32>
    %62 = arith.addf %60, %61 : vector<8x1xf32>
    %63 = tpu.reciprocal %62 : vector<8x1xf32> -> vector<8x1xf32>
    %64 = vector.broadcast %44 : vector<1x32xf32> to vector<8x32xf32>
    %65 = vector.broadcast %63 : vector<8x1xf32> to vector<8x32xf32>
    %66 = arith.mulf %64, %65 : vector<8x32xf32>
    %67 = arith.mulf %54, %66 : vector<8x32xf32>
    %68 = vector.broadcast %45 : vector<1x32xf32> to vector<8x32xf32>
    %69 = arith.addf %67, %68 : vector<8x32xf32>
    %70 = math.tanh %69 : vector<8x32xf32>
    %c0_28 = arith.constant 0 : index
    %c0_29 = arith.constant 0 : index
    %71 = vector.load %arg6[%c0_28, %c0_29] : memref<32x128xf32, #tpu.memory_space<vmem>>, vector<32x128xf32>
    %cst_30 = arith.constant dense<0.000000e+00> : vector<8x128xf32>
    %72 = tpu.matmul %70, %71, %cst_30 {dimension_numbers = #tpu.dot_dimension_numbers<[1], [0], [0], [1], [0, 0, 1, 1], [], []>} : vector<8x32xf32>, vector<32x128xf32>, vector<8x128xf32> -> vector<8x128xf32>
    %c0_31 = arith.constant 0 : index
    %c0_32 = arith.constant 0 : index
    %73 = vector.load %arg7[%c0_31, %c0_32] : memref<1x128xf32, #tpu.memory_space<vmem>>, vector<1x128xf32>
    %74 = vector.broadcast %73 : vector<1x128xf32> to vector<8x128xf32>
    %75 = arith.addf %72, %74 : vector<8x128xf32>
    %76 = math.tanh %75 : vector<8x128xf32>
    %c0_33 = arith.constant 0 : index
    %c0_34 = arith.constant 0 : index
    %77 = vector.load %arg8[%c0_33, %c0_34] : memref<8x128xf32, #tpu.memory_space<vmem>>, vector<8x128xf32>
    tpu.vector_store %arg8[%c0_33, %c0_34], %76 {strides = array<i32>} : memref<8x128xf32, #tpu.memory_space<vmem>>, vector<8x128xf32>,
    return
  }
  func.func @transform_0(%arg0: i32) -> (i32, i32) {
    %c0_i32 = arith.constant 0 : i32
    %c0_i32_0 = arith.constant 0 : i32
    return %arg0, %c0_i32 : i32, i32
  }
  func.func @transform_1(%arg0: i32) -> (i32, i32) {
    %c0_i32 = arith.constant 0 : i32
    %c0_i32_0 = arith.constant 0 : i32
    %c0_i32_1 = arith.constant 0 : i32
    return %c0_i32, %c0_i32_0 : i32, i32
  }
  func.func @transform_2(%arg0: i32) -> (i32, i32) {
    %c0_i32 = arith.constant 0 : i32
    %c0_i32_0 = arith.constant 0 : i32
    %c0_i32_1 = arith.constant 0 : i32
    return %c0_i32, %c0_i32_0 : i32, i32
  }
  func.func @transform_3(%arg0: i32) -> (i32, i32, i32) {
    %c0_i32 = arith.constant 0 : i32
    %c0_i32_0 = arith.constant 0 : i32
    %c0_i32_1 = arith.constant 0 : i32
    %c0_i32_2 = arith.constant 0 : i32
    return %c0_i32, %c0_i32_0, %c0_i32_1 : i32, i32, i32
  }
  func.func @transform_4(%arg0: i32) -> (i32, i32, i32) {
    %c0_i32 = arith.constant 0 : i32
    %c0_i32_0 = arith.constant 0 : i32
    %c0_i32_1 = arith.constant 0 : i32
    %c0_i32_2 = arith.constant 0 : i32
    return %c0_i32, %c0_i32_0, %c0_i32_1 : i32, i32, i32
  }
  func.func @transform_5(%arg0: i32) -> (i32, i32) {
    %c0_i32 = arith.constant 0 : i32
    %c0_i32_0 = arith.constant 0 : i32
    %c0_i32_1 = arith.constant 0 : i32
    return %c0_i32, %c0_i32_0 : i32, i32
  }
  func.func @transform_6(%arg0: i32) -> (i32, i32) {
    %c0_i32 = arith.constant 0 : i32
    %c0_i32_0 = arith.constant 0 : i32
    %c0_i32_1 = arith.constant 0 : i32
    return %c0_i32, %c0_i32_0 : i32, i32
  }
  func.func @transform_7(%arg0: i32) -> (i32, i32) {
    %c0_i32 = arith.constant 0 : i32
    %c0_i32_0 = arith.constant 0 : i32
    return %arg0, %c0_i32 : i32, i32
  }
}

</mosaic_0001>

<llo_original>
// kernel: tpu_custom_call.1
$region0: #{tpu_custom_call.1}
  #allocation0 [shape = 'u32[]', space=smem, size = 0x4, offset = 0x4, fixed_abs, tag = 'smem constant byte address 0x4 - core index']
  #allocation1 [shape = 'u32[72,128]{1,0:T(1,128)}', space=vmem, size = 0x9000, scoped, tag = 'internal scratch']
  %s0 = inlined_call_operand.hbm [shape: f32[16,16], index: 0, kind: input, shape index: {}]
  %s1 = inlined_call_operand.hbm [shape: f32[16,32], index: 1, kind: input, shape index: {}]
  %s2 = inlined_call_operand.vmem [shape: f32[1,32], index: 2, kind: input, shape index: {}]
  %s3 = inlined_call_operand.hbm [shape: f32[2,32,32], index: 3, kind: input, shape index: {}]
  %s4 = inlined_call_operand.vmem [shape: f32[2,3,32], index: 4, kind: input, shape index: {}]
  %s5 = inlined_call_operand.hbm [shape: f32[32,128], index: 5, kind: input, shape index: {}]
  %s6 = inlined_call_operand.vmem [shape: f32[1,128], index: 6, kind: input, shape index: {}]
  %s7 = inlined_call_operand.hbm [shape: f32[16,128], index: 7, kind: output, shape index: {}]
  %s8 = sld [smem:[#allocation0]]
  $region77: #{tpu_custom_call.1} parent=0
    _
  %s10 = ssub.s32 1, %s8
  %s11 = scalar_select 0, %s10, %s8
  $region1: #{tpu_custom_call.1} parent=0
    #allocation2 [shape = 'u8[8192]{0}', space=vmem, size = 0x2000, scoped, tag = 'input window, operand 0']
    #allocation3 [shape = 's32[2]{0}', space=sflag, size = 0x8, scoped, tag = 'scoped memory for tpu_custom_call.1']
    #allocation4 [shape = 's32[2]{0}', space=sflag, size = 0x8, scoped, tag = 'scoped memory for tpu_custom_call.1']
    #allocation5 [shape = 'u8[8192]{0}', space=vmem, size = 0x2000, scoped, tag = 'input window, operand 1, single buffered']
    #allocation6 [shape = 's32[1]{0}', space=sflag, size = 0x4, scoped, tag = 'scoped memory for tpu_custom_call.1']
    #allocation7 [shape = 'u8[32768]{0}', space=vmem, size = 0x8000, scoped, tag = 'input window, operand 3, single buffered']
    #allocation8 [shape = 'u8[16384]{0}', space=vmem, size = 0x4000, scoped, tag = 'input window, operand 5, single buffered']
    #allocation9 [shape = 's32[1]{0}', space=sflag, size = 0x4, scoped, tag = 'scoped memory for tpu_custom_call.1']
    #allocation10 [shape = 'u8[8192]{0}', space=vmem, size = 0x2000, scoped, tag = 'output window, operand 0']
    %12 = vsyncpa [#allocation3], 0
    %s13 = scalar_lea.sflag [#allocation3], 1
    %14 = vsyncpa %s13, 0
    %15 = vsyncpa [#allocation6], 0
    %16 = vsyncpa [#allocation9], 0
    %17 = vsyncpa [#allocation4], 0
    %s18 = scalar_lea.sflag [#allocation4], 1
    %19 = vsyncpa %s18, 0
    loop: start=0, step=1, limit=4
    $region2: #{tpu_custom_call.1} parent=1 // loop_pre_header
      _
    $region3: #{tpu_custom_call.1} parent=1 // loop_header
      %s21 = sphi 0, %s25
      %p22 = scmp.ge.s32.totalorder %s21, 4
      %s31 = sphi 0, %s33
      %s34 = sphi 0, %s31
      %s35 = sphi 0, %s34
      %s51 = sphi 0, %s35
      %s55 = sphi 0, %s55
      %s57 = sphi 0, %s55
      %s58 = sphi 0, %s57
      %s72 = sphi 0, %s58
      %s76 = sphi 0, %s76
      %s78 = sphi 0, %s76
      %s79 = sphi 0, %s78
      %s93 = sphi 0, %s79
      %s97 = sphi 0, %s97
      %s99 = sphi 0, %s97
      %s100 = sphi 0, %s99
      %s114 = sphi 0, %s100
      %s118 = sphi 0, %s118
      %s120 = sphi 0, %s118
      %s121 = sphi 0, %s120
      %s135 = sphi 0, %s121
      %s139 = sphi 0, %s139
      %s141 = sphi 0, %s139
      %s142 = sphi 0, %s141
      %s156 = sphi 0, %s142
      %s160 = sphi 0, %s160
      %s162 = sphi 0, %s160
      %s163 = sphi 0, %s162
      %s177 = sphi 0, %s163
      %s183 = sphi 0, %s185
      %s186 = sphi 0, %s183
      %s187 = sphi 0, %s186
      %s203 = sphi 0, %s187
    $region4: #{tpu_custom_call.1} parent=1 // loop_header_branch
      %24 = sbr.rel (%p22) target = $region8
    $region5: #{tpu_custom_call.1} parent=1 // loop_body
      %s26 = ssub.s32 %s21, 1
      %s27 = ssub.s32 %s21, 2
      %s28 = sadd.s32 %s21, 1
      %s29 = ssub.s32 %s21, %s28
      %p30 = scmp.eq.s32.totalorder %s29, 0
      %s32 = sadd.s32 %s31, 1
      %s33 = scalar_select %p30, %s31, %s32
      %p36 = pneg %p30
      %p37 = scmp.eq.s32.totalorder %s21, 1
      %p38 = por %p36, %p37
      %p39 = scmp.ne.s32.totalorder %s31, %s34
      %p40 = scmp.eq.s32.totalorder %s21, 0
      %p41 = por %p39, %p40
      %p42 = scmp.ne.s32.totalorder %s31, %s34
      %p43 = scmp.eq.s32.totalorder %s26, 1
      %p44 = por %p42, %p43
      %p45 = scmp.ne.s32.totalorder %s34, %s35
      %p46 = scmp.eq.s32.totalorder %s26, 0
      %p47 = por %p45, %p46
      %p48 = scmp.ne.s32.totalorder %s34, %s35
      %p49 = scmp.eq.s32.totalorder %s27, 1
      %p50 = por %p48, %p49
      %p52 = scmp.ne.s32.totalorder %s35, %s51
      %p53 = scmp.eq.s32.totalorder %s27, 0
      %p54 = por %p52, %p53
      %s56 = sadd.s32 %s55, 1
      %p59 = scmp.eq.s32.totalorder %s21, 1
      %p60 = scmp.ne.s32.totalorder %s55, %s57
      %p61 = scmp.eq.s32.totalorder %s21, 0
      %p62 = por %p60, %p61
      %p63 = scmp.ne.s32.totalorder %s55, %s57
      %p64 = scmp.eq.s32.totalorder %s26, 1
      %p65 = por %p63, %p64
      %p66 = scmp.ne.s32.totalorder %s57, %s58
      %p67 = scmp.eq.s32.totalorder %s26, 0
      %p68 = por %p66, %p67
      %p69 = scmp.ne.s32.totalorder %s57, %s58
      %p70 = scmp.eq.s32.totalorder %s27, 1
      %p71 = por %p69, %p70
      %p73 = scmp.ne.s32.totalorder %s58, %s72
      %p74 = scmp.eq.s32.totalorder %s27, 0
      %p75 = por %p73, %p74
      %s77 = sadd.s32 %s76, 1
      %p80 = scmp.eq.s32.totalorder %s21, 1
      %p81 = scmp.ne.s32.totalorder %s76, %s78
      %p82 = scmp.eq.s32.totalorder %s21, 0
      %p83 = por %p81, %p82
      %p84 = scmp.ne.s32.totalorder %s76, %s78
      %p85 = scmp.eq.s32.totalorder %s26, 1
      %p86 = por %p84, %p85
      %p87 = scmp.ne.s32.totalorder %s78, %s79
      %p88 = scmp.eq.s32.totalorder %s26, 0
      %p89 = por %p87, %p88
      %p90 = scmp.ne.s32.totalorder %s78, %s79
      %p91 = scmp.eq.s32.totalorder %s27, 1
      %p92 = por %p90, %p91
      %p94 = scmp.ne.s32.totalorder %s79, %s93
      %p95 = scmp.eq.s32.totalorder %s27, 0
      %p96 = por %p94, %p95
      %s98 = sadd.s32 %s97, 1
      %p101 = scmp.eq.s32.totalorder %s21, 1
      %p102 = scmp.ne.s32.totalorder %s97, %s99
      %p103 = scmp.eq.s32.totalorder %s21, 0
      %p104 = por %p102, %p103
      %p105 = scmp.ne.s32.totalorder %s97, %s99
      %p106 = scmp.eq.s32.totalorder %s26, 1
      %p107 = por %p105, %p106
      %p108 = scmp.ne.s32.totalorder %s99, %s100
      %p109 = scmp.eq.s32.totalorder %s26, 0
      %p110 = por %p108, %p109
      %p111 = scmp.ne.s32.totalorder %s99, %s100
      %p112 = scmp.eq.s32.totalorder %s27, 1
      %p113 = por %p111, %p112
      %p115 = scmp.ne.s32.totalorder %s100, %s114
      %p116 = scmp.eq.s32.totalorder %s27, 0
      %p117 = por %p115, %p116
      %s119 = sadd.s32 %s118, 1
      %p122 = scmp.eq.s32.totalorder %s21, 1
      %p123 = scmp.ne.s32.totalorder %s118, %s120
      %p124 = scmp.eq.s32.totalorder %s21, 0
      %p125 = por %p123, %p124
      %p126 = scmp.ne.s32.totalorder %s118, %s120
      %p127 = scmp.eq.s32.totalorder %s26, 1
      %p128 = por %p126, %p127
      %p129 = scmp.ne.s32.totalorder %s120, %s121
      %p130 = scmp.eq.s32.totalorder %s26, 0
      %p131 = por %p129, %p130
      %p132 = scmp.ne.s32.totalorder %s120, %s121
      %p133 = scmp.eq.s32.totalorder %s27, 1
      %p134 = por %p132, %p133
      %p136 = scmp.ne.s32.totalorder %s121, %s135
      %p137 = scmp.eq.s32.totalorder %s27, 0
      %p138 = por %p136, %p137
      %s140 = sadd.s32 %s139, 1
      %p143 = scmp.eq.s32.totalorder %s21, 1
      %p144 = scmp.ne.s32.totalorder %s139, %s141
      %p145 = scmp.eq.s32.totalorder %s21, 0
      %p146 = por %p144, %p145
      %p147 = scmp.ne.s32.totalorder %s139, %s141
      %p148 = scmp.eq.s32.totalorder %s26, 1
      %p149 = por %p147, %p148
      %p150 = scmp.ne.s32.totalorder %s141, %s142
      %p151 = scmp.eq.s32.totalorder %s26, 0
      %p152 = por %p150, %p151
      %p153 = scmp.ne.s32.totalorder %s141, %s142
      %p154 = scmp.eq.s32.totalorder %s27, 1
      %p155 = por %p153, %p154
      %p157 = scmp.ne.s32.totalorder %s142, %s156
      %p158 = scmp.eq.s32.totalorder %s27, 0
      %p159 = por %p157, %p158
      %s161 = sadd.s32 %s160, 1
      %p164 = scmp.eq.s32.totalorder %s21, 1
      %p165 = scmp.ne.s32.totalorder %s160, %s162
      %p166 = scmp.eq.s32.totalorder %s21, 0
      %p167 = por %p165, %p166
      %p168 = scmp.ne.s32.totalorder %s160, %s162
      %p169 = scmp.eq.s32.totalorder %s26, 1
      %p170 = por %p168, %p169
      %p171 = scmp.ne.s32.totalorder %s162, %s163
      %p172 = scmp.eq.s32.totalorder %s26, 0
      %p173 = por %p171, %p172
      %p174 = scmp.ne.s32.totalorder %s162, %s163
      %p175 = scmp.eq.s32.totalorder %s27, 1
      %p176 = por %p174, %p175
      %p178 = scmp.ne.s32.totalorder %s163, %s177
      %p179 = scmp.eq.s32.totalorder %s27, 0
      %p180 = por %p178, %p179
      %s181 = ssub.s32 %s21, %s28
      %p182 = scmp.eq.s32.totalorder %s181, 0
      %s184 = sadd.s32 %s183, 1
      %s185 = scalar_select %p182, %s183, %s184
      %p188 = pneg %p182
      %p189 = scmp.eq.s32.totalorder %s21, 1
      %p190 = por %p188, %p189
      %p191 = scmp.ne.s32.totalorder %s183, %s186
      %p192 = scmp.eq.s32.totalorder %s21, 0
      %p193 = por %p191, %p192
      %p194 = scmp.ne.s32.totalorder %s183, %s186
      %p195 = scmp.eq.s32.totalorder %s26, 1
      %p196 = por %p194, %p195
      %p197 = scmp.ne.s32.totalorder %s186, %s187
      %p198 = scmp.eq.s32.totalorder %s26, 0
      %p199 = por %p197, %p198
      %p200 = scmp.ne.s32.totalorder %s186, %s187
      %p201 = scmp.eq.s32.totalorder %s27, 1
      %p202 = por %p200, %p201
      %p204 = scmp.ne.s32.totalorder %s187, %s203
      %p205 = scmp.eq.s32.totalorder %s27, 0
      %p206 = por %p204, %p205
      %p207 = scmp.le.s32.totalorder 1, %s21
      %p208 = scmp.lt.s32.totalorder %s21, 3
      %p209 = pnand %p207, %p208
      %p210 = pneg %p209
      // Predicated region
      $region9: #{tpu_custom_call.1} parent=5 // pred_check
        _
      $region10: #{tpu_custom_call.1} parent=5 // pred_check_branch
        %212 = sbr.rel (%p209) target = $region12
      $region11: #{tpu_custom_call.1} parent=5 // pred_region
        %s213 = ssub.s32 %s21, 1
        // Predicated region
        $region13: #{tpu_custom_call.1} parent=11 // pred_check
          %p214 = pneg %p68
        $region14: #{tpu_custom_call.1} parent=11 // pred_check_branch
          %216 = sbr.rel (%p214) target = $region16
        $region15: #{tpu_custom_call.1} parent=11 // pred_region
          %218 = vsyncadd [#allocation6], 0
          %s219 = sshll.u32 %s1, 4
          %s220 = int_to_ptr.hbm [resolvable:$true] %s219
          %s221 = sshll.u32 [#allocation5], 4
          %s222 = int_to_ptr.vmem [resolvable:$true] %s221
          %227 = dma.hbm_to_vmem [thread:$0]  %s220, 256, %s222, [#allocation6], 128, 128, 8
        $region16: #{tpu_custom_call.1} parent=11 // pred_fallthru
          _
        // Predicated region
        $region17: #{tpu_custom_call.1} parent=11 // pred_check
          %p228 = pneg %p89
        $region18: #{tpu_custom_call.1} parent=11 // pred_check_branch
          %230 = sbr.rel (%p228) target = $region20
        $region19: #{tpu_custom_call.1} parent=11 // pred_region
          _
        $region20: #{tpu_custom_call.1} parent=11 // pred_fallthru
          _
        // Predicated region
        $region21: #{tpu_custom_call.1} parent=11 // pred_check
          %p231 = pneg %p110
        $region22: #{tpu_custom_call.1} parent=11 // pred_check_branch
          %233 = sbr.rel (%p231) target = $region24
        $region23: #{tpu_custom_call.1} parent=11 // pred_region
          %235 = vsyncadd [#allocation6], 0
          %s236 = sshll.u32 %s3, 4
          %s237 = int_to_ptr.hbm [resolvable:$true] %s236
          %s238 = sshll.u32 [#allocation7], 4
          %s239 = int_to_ptr.vmem [resolvable:$true] %s238
          %244 = dma.hbm_to_vmem [thread:$0]  %s237, 1024, %s239, [#allocation6], 128, 128, 8
        $region24: #{tpu_custom_call.1} parent=11 // pred_fallthru
          _
        // Predicated region
        $region25: #{tpu_custom_call.1} parent=11 // pred_check
          %p245 = pneg %p131
        $region26: #{tpu_custom_call.1} parent=11 // pred_check_branch
          %247 = sbr.rel (%p245) target = $region28
        $region27: #{tpu_custom_call.1} parent=11 // pred_region
          _
        $region28: #{tpu_custom_call.1} parent=11 // pred_fallthru
          _
        // Predicated region
        $region29: #{tpu_custom_call.1} parent=11 // pred_check
          %p248 = pneg %p152
        $region30: #{tpu_custom_call.1} parent=11 // pred_check_branch
          %250 = sbr.rel (%p248) target = $region32
        $region31: #{tpu_custom_call.1} parent=11 // pred_region
          %252 = vsyncadd [#allocation9], 0
          %s253 = sshll.u32 %s5, 4
          %s254 = int_to_ptr.hbm [resolvable:$true] %s253
          %s255 = sshll.u32 [#allocation8], 4
          %s256 = int_to_ptr.vmem [resolvable:$true] %s255
          %261 = dma.hbm_to_vmem [thread:$0]  %s254, 512, %s256, [#allocation9], 128, 128, 8
        $region32: #{tpu_custom_call.1} parent=11 // pred_fallthru
          _
        // Predicated region
        $region33: #{tpu_custom_call.1} parent=11 // pred_check
          %p262 = pneg %p173
        $region34: #{tpu_custom_call.1} parent=11 // pred_check_branch
          %264 = sbr.rel (%p262) target = $region36
        $region35: #{tpu_custom_call.1} parent=11 // pred_region
          _
        $region36: #{tpu_custom_call.1} parent=11 // pred_fallthru
          _
      $region12: #{tpu_custom_call.1} parent=5 // pred_fallthru
        _
      %p265 = scmp.lt.s32.totalorder %s21, 2
      // Predicated region
      $region37: #{tpu_custom_call.1} parent=5 // pred_check
        %p266 = pneg %p265
      $region38: #{tpu_custom_call.1} parent=5 // pred_check_branch
        %268 = sbr.rel (%p266) target = $region40
      $region39: #{tpu_custom_call.1} parent=5 // pred_region
        // Predicated region
        $region41: #{tpu_custom_call.1} parent=39 // pred_check
          %p269 = pneg %p41
        $region42: #{tpu_custom_call.1} parent=39 // pred_check_branch
          %271 = sbr.rel (%p269) target = $region44
        $region43: #{tpu_custom_call.1} parent=39 // pred_region
          %s272 = sand.u32 %s31, 1
          %s273 = scalar_lea.sflag [#allocation3], %s272
          %s274 = sand.u32 %s31, 1
          %s275 = smul.addr %s274, 8
          %s276 = scalar_lea.vmem [#allocation2], %s275
          %278 = vsyncadd %s273, 0
          %s279 = smul.addr %s21, 8
          %s280 = scalar_lea.hbm %s0, %s279
          %s282 = sshll.u32 %s280, 4
          %s283 = int_to_ptr.hbm [resolvable:$true] %s282
          %s284 = sshll.u32 %s276, 4
          %s285 = int_to_ptr.vmem [resolvable:$true] %s284
          %287 = dma.hbm_to_vmem [thread:$0]  %s283, 128, %s285, %s273
        $region44: #{tpu_custom_call.1} parent=39 // pred_fallthru
          _
      $region40: #{tpu_custom_call.1} parent=5 // pred_fallthru
        _
      %p288 = scmp.le.s32.totalorder 1, %s21
      %p289 = scmp.lt.s32.totalorder %s21, 3
      %p290 = pnand %p288, %p289
      %p291 = pneg %p290
      // Predicated region
      $region45: #{tpu_custom_call.1} parent=5 // pred_check
        _
      $region46: #{tpu_custom_call.1} parent=5 // pred_check_branch
        %293 = sbr.rel (%p290) target = $region48
      $region47: #{tpu_custom_call.1} parent=5 // pred_region
        %s294 = ssub.s32 %s21, 1
        %s295 = sand.u32 %s34, 1
        %s296 = scalar_lea.sflag [#allocation3], %s295
        %s297 = sand.u32 %s34, 1
        %s298 = smul.addr %s297, 8
        %s299 = scalar_lea.vmem [#allocation2], %s298
        // Predicated region
        $region49: #{tpu_custom_call.1} parent=47 // pred_check
          %p300 = pneg %p47
        $region50: #{tpu_custom_call.1} parent=47 // pred_check_branch
          %302 = sbr.rel (%p300) target = $region52
        $region51: #{tpu_custom_call.1} parent=47 // pred_region
          %304 = dma.done %s296, 128
        $region52: #{tpu_custom_call.1} parent=47 // pred_fallthru
          _
        // Predicated region
        $region53: #{tpu_custom_call.1} parent=47 // pred_check
          %p305 = pneg %p68
        $region54: #{tpu_custom_call.1} parent=47 // pred_check_branch
          %307 = sbr.rel (%p305) target = $region56
        $region55: #{tpu_custom_call.1} parent=47 // pred_region
          %309 = dma.done [#allocation6], 256
        $region56: #{tpu_custom_call.1} parent=47 // pred_fallthru
          _
        // Predicated region
        $region57: #{tpu_custom_call.1} parent=47 // pred_check
          %p310 = pneg %p110
        $region58: #{tpu_custom_call.1} parent=47 // pred_check_branch
          %312 = sbr.rel (%p310) target = $region60
        $region59: #{tpu_custom_call.1} parent=47 // pred_region
          %314 = dma.done [#allocation6], 1024
        $region60: #{tpu_custom_call.1} parent=47 // pred_fallthru
          _
        // Predicated region
        $region61: #{tpu_custom_call.1} parent=47 // pred_check
          %p315 = pneg %p152
        $region62: #{tpu_custom_call.1} parent=47 // pred_check_branch
          %317 = sbr.rel (%p315) target = $region64
        $region63: #{tpu_custom_call.1} parent=47 // pred_region
          %319 = dma.done [#allocation9], 512
        $region64: #{tpu_custom_call.1} parent=47 // pred_fallthru
          _
        %s320 = sand.u32 %s34, 1
        %s321 = scalar_lea.sflag [#allocation3], %s320
        %s322 = sand.u32 %s34, 1
        %s323 = smul.addr %s322, 8
        %s324 = scalar_lea.vmem [#allocation2], %s323
        %p325 = pneg %p47
        %p326 = pneg %p44
        %p327 = pneg %p68
        %p328 = pneg %p65
        %p329 = pneg %p89
        %p330 = pneg %p86
        %p331 = pneg %p110
        %p332 = pneg %p107
        %p333 = pneg %p131
        %p334 = pneg %p128
        %p335 = pneg %p152
        %p336 = pneg %p149
        %p337 = pneg %p173
        %p338 = pneg %p170
        %p339 = pneg %p199
        %p340 = pneg %p196
        %s341 = sand.u32 %s186, 1
        %s342 = scalar_lea.sflag [#allocation4], %s341
        %s343 = sand.u32 %s186, 1
        %s344 = smul.addr %s343, 8
        %s345 = scalar_lea.vmem [#allocation10], %s344
        %v346 = vld [vmem:[%s299] sm:$0xff]
        %v347 = vld [vmem:[#allocation5] sm:$0xff]
        %v348 = vld [vmem:[#allocation5 + $0x8] sm:$0xff]
        %v349 = vld [vmem:[%s2] sm:$0x1]
        %v351 = vperm.slane %v349, 0
        %vm353 = vcmask 130048
        %v355 = vsel %vm353, %v346, 0
        %357 = vmatpush.msra.mxu0 0.0
        %358 = vmatpush.msra.mxu0 0.0
        %359 = vmatpush.msra.mxu0 0.0
        %360 = vmatpush.msra.mxu0 0.0
        %361 = vmatpush.msra.mxu0 0.0
        %362 = vmatpush.msra.mxu0 0.0
        %363 = vmatpush.msra.mxu0 0.0
        %364 = vmatpush.msra.mxu0 0.0
        %365 = vmatpush.msra.mxu0 0.0
        %366 = vmatpush.msra.mxu0 0.0
        %367 = vmatpush.msra.mxu0 0.0
        %368 = vmatpush.msra.mxu0 0.0
        %369 = vmatpush.msra.mxu0 0.0
        %370 = vmatpush.msra.mxu0 0.0
        %371 = vmatpush.msra.mxu0 %v348
        %372 = vmatpush.msra.mxu0 %v347
        %373 = vmatmul.f32.gmra.mxu0 %v355
        %v374 = vpop.f32.mrf.mxu0
        %v375 = vadd.f32 %v351, %v374
        %376 = vdwg.mxu0
        %v377 = vtanh.pop %v375
        %v378 = vld [vmem:[#allocation7] sm:$0xff]
        %v379 = vld [vmem:[#allocation7 + $0x8] sm:$0xff]
        %v380 = vld [vmem:[#allocation7 + $0x10] sm:$0xff]
        %v381 = vld [vmem:[#allocation7 + $0x18] sm:$0xff]
        %v382 = vld [vmem:[%s4] sm:$0x7]
        %v383 = vperm.slane %v382, 0
        %vm384 = vcmask 261120
        %v386 = vsel %vm384, %v377, 0
        %388 = vmatpush.msra.mxu0 0.0
        %389 = vmatpush.msra.mxu0 0.0
        %390 = vmatpush.msra.mxu0 0.0
        %391 = vmatpush.msra.mxu0 0.0
        %392 = vmatpush.msra.mxu0 0.0
        %393 = vmatpush.msra.mxu0 0.0
        %394 = vmatpush.msra.mxu0 0.0
        %395 = vmatpush.msra.mxu0 0.0
        %396 = vmatpush.msra.mxu0 0.0
        %397 = vmatpush.msra.mxu0 0.0
        %398 = vmatpush.msra.mxu0 0.0
        %399 = vmatpush.msra.mxu0 0.0
        %400 = vmatpush.msra.mxu0 %v381
        %401 = vmatpush.msra.mxu0 %v380
        %402 = vmatpush.msra.mxu0 %v379
        %403 = vmatpush.msra.mxu0 %v378
        %404 = vmatmul.f32.gmra.mxu0 %v386
        %v405 = vpop.f32.mrf.mxu0
        %v406 = vadd.f32 %v383, %v405
        %407 = vdwg.mxu0
        %v408 = vsel %vm384, %v406, 0.0
        %409 = vadd.xlane.f32.xlu0 %v408
        %v410 = vpop.xlane.xlu0 %409
        %v411 = vrcp.pop 32.0
        %v412 = vmul.f32 32.0, %v411
        %v413 = vsub.f32 1.0, %v412
        %v414 = vmul.f32 %v411, %v413
        %v415 = vadd.f32 %v411, %v414
        %vm416 = vweird.f32 %v411
        %v417 = vsel %vm416, %v411, %v415
        %v418 = vmul.f32 %v410, %v417
        %v419 = vsub.f32 %v406, %v418
        %v420 = vmul.f32 %v419, %v419
        %v421 = vsel %vm384, %v420, 0.0
        %422 = vadd.xlane.f32.xlu0 %v421
        %v423 = vpop.xlane.xlu0 %422
        %v424 = vmul.f32 %v423, 0.032258064
        %v425 = vrsqrt.pop %v424
        %v426 = vmul.f32 %v425, %v424
        %v427 = vmul.f32 %v426, %v425
        %v428 = vmul.f32 0.5, %v427
        %v429 = vsub.f32 1.5, %v428
        %v430 = vmul.f32 %v425, %v429
        %v431 = vmul.f32 %v424, %v430
        %vm432 = vcmp.eq.f32.partialorder %v424, inf
        %v433 = vsel %vm432, %v424, %v431
        %vm434 = vcmp.eq.f32.partialorder %v424, 0.0
        %v435 = vand.u32 %v424, 2147483648
        %v436 = vsel %vm434, %v435, %v433
        %v437 = vadd.f32 %v436, 1e-06
        %v438 = vrcp.pop %v437
        %v439 = vmul.f32 %v437, %v438
        %v440 = vsub.f32 1.0, %v439
        %v441 = vmul.f32 %v438, %v440
        %v442 = vadd.f32 %v438, %v441
        %vm443 = vweird.f32 %v437
        %vm444 = vweird.f32 %v438
        %vm445 = vmor %vm443, %vm444
        %v446 = vsel %vm445, %v438, %v442
        %v447 = vand.u32 2147483647, %v437
        %vm448 = vcmp.eq.f32.partialorder %v447, 8.507059e+37
        %v449 = vand.u32 %v437, 2147483648
        %v450 = vor.u32 1.1754944e-38, %v449
        %v451 = vsel %vm448, %v450, %v446
        %v452 = vperm.slane %v382, 1
        %v453 = vmul.f32 %v452, %v451
        %v454 = vmul.f32 %v419, %v453
        %v455 = vperm.slane %v382, 2
        %v456 = vadd.f32 %v454, %v455
        %v457 = vtanh.pop %v456
        %s458 = scalar_lea.vmem [#allocation7], 32
        %v459 = vld [vmem:[%s458] sm:$0xff]
        %v460 = vld [vmem:[%s458 + $0x8] sm:$0xff]
        %v461 = vld [vmem:[%s458 + $0x10] sm:$0xff]
        %v462 = vld [vmem:[%s458 + $0x18] sm:$0xff]
        %s463 = scalar_lea.vmem %s4, 4
        %v464 = vld [vmem:[%s463] sm:$0x7]
        %v465 = vperm.slane %v464, 0
        %v467 = vsel %vm384, %v457, 0
        %469 = vmatpush.msra.mxu0 0.0
        %470 = vmatpush.msra.mxu0 0.0
        %471 = vmatpush.msra.mxu0 0.0
        %472 = vmatpush.msra.mxu0 0.0
        %473 = vmatpush.msra.mxu0 0.0
        %474 = vmatpush.msra.mxu0 0.0
        %475 = vmatpush.msra.mxu0 0.0
        %476 = vmatpush.msra.mxu0 0.0
        %477 = vmatpush.msra.mxu0 0.0
        %478 = vmatpush.msra.mxu0 0.0
        %479 = vmatpush.msra.mxu0 0.0
        %480 = vmatpush.msra.mxu0 0.0
        %481 = vmatpush.msra.mxu0 %v462
        %482 = vmatpush.msra.mxu0 %v461
        %483 = vmatpush.msra.mxu0 %v460
        %484 = vmatpush.msra.mxu0 %v459
        %485 = vmatmul.f32.gmra.mxu0 %v467
        %v486 = vpop.f32.mrf.mxu0
        %v487 = vadd.f32 %v465, %v486
        %488 = vdwg.mxu0
        %v489 = vsel %vm384, %v487, 0.0
        %490 = vadd.xlane.f32.xlu0 %v489
        %v491 = vpop.xlane.xlu0 %490
        %v492 = vmul.f32 %v491, %v417
        %v493 = vsub.f32 %v487, %v492
        %v494 = vmul.f32 %v493, %v493
        %v495 = vsel %vm384, %v494, 0.0
        %496 = vadd.xlane.f32.xlu0 %v495
        %v497 = vpop.xlane.xlu0 %496
        %v498 = vmul.f32 %v497, 0.032258064
        %v499 = vrsqrt.pop %v498
        %v500 = vmul.f32 %v499, %v498
        %v501 = vmul.f32 %v500, %v499
        %v502 = vmul.f32 0.5, %v501
        %v503 = vsub.f32 1.5, %v502
        %v504 = vmul.f32 %v499, %v503
        %v505 = vmul.f32 %v498, %v504
        %vm506 = vcmp.eq.f32.partialorder %v498, inf
        %v507 = vsel %vm506, %v498, %v505
        %vm508 = vcmp.eq.f32.partialorder %v498, 0.0
        %v509 = vand.u32 %v498, 2147483648
        %v510 = vsel %vm508, %v509, %v507
        %v511 = vadd.f32 %v510, 1e-06
        %v512 = vrcp.pop %v511
        %v513 = vmul.f32 %v511, %v512
        %v514 = vsub.f32 1.0, %v513
        %v515 = vmul.f32 %v512, %v514
        %v516 = vadd.f32 %v512, %v515
        %vm517 = vweird.f32 %v511
        %vm518 = vweird.f32 %v512
        %vm519 = vmor %vm517, %vm518
        %v520 = vsel %vm519, %v512, %v516
        %v521 = vand.u32 2147483647, %v511
        %vm522 = vcmp.eq.f32.partialorder %v521, 8.507059e+37
        %v523 = vand.u32 %v511, 2147483648
        %v524 = vor.u32 1.1754944e-38, %v523
        %v525 = vsel %vm522, %v524, %v520
        %v526 = vperm.slane %v464, 1
        %v527 = vmul.f32 %v526, %v525
        %v528 = vmul.f32 %v493, %v527
        %v529 = vperm.slane %v464, 2
        %v530 = vadd.f32 %v528, %v529
        %v531 = vtanh.pop %v530
        %v532 = vld [vmem:[#allocation8] sm:$0xff]
        %v533 = vld [vmem:[#allocation8 + $0x8] sm:$0xff]
        %v534 = vld [vmem:[#allocation8 + $0x10] sm:$0xff]
        %v535 = vld [vmem:[#allocation8 + $0x18] sm:$0xff]
        %v536 = vld [vmem:[%s6] sm:$0x1]
        %v538 = vperm.slane %v536, 0
        %v541 = vsel %vm384, %v531, 0
        %543 = vmatpush.msra.mxu0 0.0
        %544 = vmatpush.msra.mxu0 0.0
        %545 = vmatpush.msra.mxu0 0.0
        %546 = vmatpush.msra.mxu0 0.0
        %547 = vmatpush.msra.mxu0 0.0
        %548 = vmatpush.msra.mxu0 0.0
        %549 = vmatpush.msra.mxu0 0.0
        %550 = vmatpush.msra.mxu0 0.0
        %551 = vmatpush.msra.mxu0 0.0
        %552 = vmatpush.msra.mxu0 0.0
        %553 = vmatpush.msra.mxu0 0.0
        %554 = vmatpush.msra.mxu0 0.0
        %555 = vmatpush.msra.mxu0 %v535
        %556 = vmatpush.msra.mxu0 %v534
        %557 = vmatpush.msra.mxu0 %v533
        %558 = vmatpush.msra.mxu0 %v532
        %559 = vmatmul.f32.gmra.mxu0 %v541
        %v560 = vpop.f32.mrf.mxu0
        %v561 = vadd.f32 %v538, %v560
        %562 = vdwg.mxu0
        %v563 = vtanh.pop %v561
        %564 = vst [vmem:[%s345] sm:$0xff] %v563
        %s565 = sand.u32 %s186, 1
        %s566 = scalar_lea.sflag [#allocation4], %s565
        %s567 = sand.u32 %s186, 1
        %s568 = smul.addr %s567, 8
        %s569 = scalar_lea.vmem [#allocation10], %s568
        // Predicated region
        $region65: #{tpu_custom_call.1} parent=47 // pred_check
          %p570 = pneg %p196
        $region66: #{tpu_custom_call.1} parent=47 // pred_check_branch
          %572 = sbr.rel (%p570) target = $region68
        $region67: #{tpu_custom_call.1} parent=47 // pred_region
          %574 = vsyncadd %s566, 0
          %s575 = smul.addr %s26, 8
          %s576 = scalar_lea.hbm %s7, %s575
          %s578 = sshll.u32 %s569, 4
          %s579 = int_to_ptr.vmem [resolvable:$true] %s578
          %s580 = sshll.u32 %s576, 4
          %s581 = int_to_ptr.hbm [resolvable:$true] %s580
          %583 = dma.vmem_to_hbm [thread:$0]  %s579, 128, %s581, %s566
        $region68: #{tpu_custom_call.1} parent=47 // pred_fallthru
          _
      $region48: #{tpu_custom_call.1} parent=5 // pred_fallthru
        _
      %p584 = scmp.le.s32.totalorder 2, %s21
      // Predicated region
      $region69: #{tpu_custom_call.1} parent=5 // pred_check
        %p585 = pneg %p584
      $region70: #{tpu_custom_call.1} parent=5 // pred_check_branch
        %587 = sbr.rel (%p585) target = $region72
      $region71: #{tpu_custom_call.1} parent=5 // pred_region
        %s588 = ssub.s32 %s21, 2
        // Predicated region
        $region73: #{tpu_custom_call.1} parent=71 // pred_check
          %p589 = pneg %p202
        $region74: #{tpu_custom_call.1} parent=71 // pred_check_branch
          %591 = sbr.rel (%p589) target = $region76
        $region75: #{tpu_custom_call.1} parent=71 // pred_region
          %s592 = sand.u32 %s187, 1
          %s593 = scalar_lea.sflag [#allocation4], %s592
          %s594 = sand.u32 %s187, 1
          %s595 = smul.addr %s594, 8
          %s596 = scalar_lea.vmem [#allocation10], %s595
          %598 = dma.done %s593, 128
        $region76: #{tpu_custom_call.1} parent=71 // pred_fallthru
          _
      $region72: #{tpu_custom_call.1} parent=5 // pred_fallthru
        _
    $region6: #{tpu_custom_call.1} parent=1 // loop_footer
      %s25 = sadd.s32 1, %s21
    $region7: #{tpu_custom_call.1} parent=1 // loop_footer_branch
      %20 = sbr.rel target = $region3
    $region8: #{tpu_custom_call.1} parent=1 // loop_exit
      _
    %599 = vsyncpa [#allocation3], 1
    %s600 = scalar_lea.sflag [#allocation3], 1
    %601 = vsyncpa %s600, 1
    %602 = vsyncpa [#allocation6], 1
    %603 = vsyncpa [#allocation9], 1
    %604 = vsyncpa [#allocation4], 1
    %s605 = scalar_lea.sflag [#allocation4], 1
    %606 = vsyncpa %s605, 1

</llo_original>
